<compile_context>
chip_gen: v6e
topology: v6e:2x2x1
jax: 0.10.0
libtpu: 0.0.40
codegen_flags: <defaults>
</compile_context>

<pallas_src>
import functools

import jax
import jax.numpy as jnp
from jax.experimental import pallas as pl
from jax.experimental.pallas import tpu as pltpu


# ---------------- Fused Pallas kernel ----------------

def mha_fused_kernel(x_ref, wqkv_ref, bqkv_ref, gidr_ref, gidc_ref,
                     wo_ref, bo_ref, g_ref, beta_ref, o_ref, ctx_ref,
                     *, num_head, dim_head, eps):
    f32 = jnp.float32
    bf16 = jnp.bfloat16
    H, D = num_head, dim_head
    BL, M = x_ref.shape          # (batch*seq, dim_model)
    BHL = H * BL                 # total "tokens" across all (batch, head) groups

    x = x_ref[...]               # (BL, M) f32 — kept f32 for residual / LayerNorm
    x_bf = x.astype(bf16)

    # ---- fused QKV projection: one wide bf16 MXU pass (scale pre-folded) ----
    qkv = jnp.dot(x_bf, wqkv_ref[...],
                  preferred_element_type=f32) + bqkv_ref[...]        # (BL, 3M) f32

    # ---- build (B*H*L, D) token matrices, row r = c*BL + j holds the
    #      c-th D-wide column chunk of row j.  This is exactly the token set of
    #      torch's .view(B*H, L, D) (tokens merely reordered within each
    #      (batch, head) group — attention is invariant to that). ----
    def gather(t):   # t = 0/1/2 for Q/K/V
        base = t * M
        return jnp.concatenate(
            [qkv[:, base + c * D: base + (c + 1) * D] for c in range(H)], axis=0)

    q = gather(0).astype(bf16)                                        # (BHL, D)
    k = gather(1).astype(bf16)
    v = gather(2).astype(bf16)

    # ---- ONE batched score matmul for all (batch, head) groups + group mask ----
    s = jax.lax.dot_general(q, k, (((1,), (1,)), ((), ())),
                            preferred_element_type=f32)               # (BHL, BHL)
    same_group = gidr_ref[...] == gidc_ref[...]                        # (BHL, BHL)
    s = jnp.where(same_group, s, -1e30)

    # exact softmax (f32)
    s = s - jnp.max(s, axis=-1, keepdims=True)
    p = jnp.exp(s)
    p = p / jnp.sum(p, axis=-1, keepdims=True)

    ctx = jnp.dot(p.astype(bf16), v, preferred_element_type=f32)       # (BHL, D)

    # ---- fold heads back:  ctx2[j, c*D + d] = ctx[c*BL + j, d]
    #      written chunk-by-chunk into lane windows of a VMEM scratch, then a
    #      single (BL, M) x (M, M) output projection (no zero-padded matmuls).
    #      (Loops over H only; switch to lax.fori_loop(unroll=True) if H grows.)
    for c in range(H):
        ctx_ref[:, c * D:(c + 1) * D] = ctx[c * BL:(c + 1) * BL, :]
    out = jnp.dot(ctx_ref[...].astype(bf16), wo_ref[...],
                  preferred_element_type=f32) + bo_ref[...] + x        # (BL, M)

    # ---- LayerNorm (biased variance, eps=1e-5); dropout p=0.0 -> identity ----
    mean = jnp.mean(out, axis=-1, keepdims=True)
    cen = out - mean
    var = jnp.mean(cen * cen, axis=-1, keepdims=True)
    o_ref[...] = cen * jax.lax.rsqrt(var + eps) * g_ref[...] + beta_ref[...]


# ---------------- Wrapper ----------------

def pack_params(params, num_head):
    """Pre-transpose / pack / scale / cast weights ONCE (outside the forward)."""
    M = params["wq"].shape[0]
    D = M // num_head
    scale = float(D) ** (-0.5)
    w_qkv = jnp.concatenate(
        [params["wq"].T * scale, params["wk"].T, params["wv"].T], axis=1)  # (M, 3M)
    b_qkv = jnp.concatenate(
        [params["bq"] * scale, params["bk"], params["bv"]]).reshape(1, 3 * M)
    return {
        "w_qkv": w_qkv.astype(jnp.bfloat16),       # bf16 MXU operands
        "b_qkv": b_qkv.astype(jnp.float32),        # biases stay f32 (added post-acc)
        "wo_t": params["wo"].T.astype(jnp.bfloat16),
        "bo": params["bo"].reshape(1, M).astype(jnp.float32),
        "ln_w": params["ln_w"].reshape(1, M).astype(jnp.float32),
        "ln_b": params["ln_b"].reshape(1, M).astype(jnp.float32),
    }


def multi_head_attention(x, packed, num_head):
    B, L, M = x.shape
    assert M % num_head == 0
    D = M // num_head
    BL, BHL = B * L, B * num_head * L

    # Single grid step over the whole (B*L, M) slab (per-step grid overhead
    # dominates at these shapes on 1-TC chips); batch folded into the rows.
    x2 = x.reshape(BL, M)

    # Group-id of each token row (segment-id pattern): row r = c*BL + j belongs to
    # (batch, head) group  b*H + ((l*H + c) // L)  with j = b*L + l.  Works for any
    # L, H (no L % H == 0 assumption).  Precomputed here -> no in-kernel int div.
    r = jnp.arange(BHL, dtype=jnp.int32)
    c = r // BL
    j = r % BL
    gid = (j // L) * num_head + ((j % L) * num_head + c) // L
    gid_rows = gid.reshape(BHL, 1)
    gid_cols = gid.reshape(1, BHL)

    kernel = functools.partial(
        mha_fused_kernel, num_head=num_head, dim_head=D, eps=1e-5)

    def full(shape):                       # whole-array block, single grid step
        return pl.BlockSpec(shape, lambda i: (0,) * len(shape))

    out2 = pl.pallas_call(
        kernel,
        out_shape=jax.ShapeDtypeStruct((BL, M), jnp.float32),
        grid=(1,),
        in_specs=[full((BL, M)),
                  full((M, 3 * M)), full((1, 3 * M)),
                  full((BHL, 1)), full((1, BHL)),
                  full((M, M)), full((1, M)),
                  full((1, M)), full((1, M))],
        out_specs=full((BL, M)),
        scratch_shapes=[pltpu.VMEM((BL, M), jnp.float32)],   # folded-context scratch
        compiler_params=pltpu.CompilerParams(
            dimension_semantics=("arbitrary",)),
    )(x2, packed["w_qkv"], packed["b_qkv"], gid_rows, gid_cols,
      packed["wo_t"], packed["bo"], packed["ln_w"], packed["ln_b"])

    return out2.reshape(B, L, M)


# ---------------- Pure-JAX reference (mirrors the PyTorch module, f32) ----------------

def reference(x, params, num_head):
    B, L, M = x.shape
    D = M // num_head
    q = x @ params["wq"].T + params["bq"]
    k = x @ params["wk"].T + params["bk"]
    v = x @ params["wv"].T + params["bv"]
    q = q.reshape(B * num_head, -1, D)
    k = k.reshape(B * num_head, -1, D)
    v = v.reshape(B * num_head, -1, D)
    scale = D ** (-0.5)
    att = jax.nn.softmax(jnp.einsum("bqd,bkd->bqk", q, k) * scale, axis=-1)
    ctx = jnp.einsum("bqk,bkd->bqd", att, v).reshape(B, -1, M)
    out = ctx @ params["wo"].T + params["bo"]
    out = out + x
    mean = jnp.mean(out, axis=-1, keepdims=True)
    var = jnp.mean((out - mean) ** 2, axis=-1, keepdims=True)
    return (out - mean) * jax.lax.rsqrt(var + 1e-5) * params["ln_w"] + params["ln_b"]


# ---------------- Main ----------------

if __name__ == "__main__":
    B, L, M, H = 2, 8, 32, 4   # batch, seq, dim_model, num_head  (dim_head = 8)

    key = jax.random.PRNGKey(0)
    keys = jax.random.split(key, 9)
    bound = 1.0 / (M ** 0.5)   # PyTorch nn.Linear default init bound

    def uni(k, shape):
        return jax.random.uniform(k, shape, jnp.float32, -bound, bound)

    params = {
        "wq": uni(keys[0], (M, M)), "bq": uni(keys[1], (M,)),
        "wk": uni(keys[2], (M, M)), "bk": uni(keys[3], (M,)),
        "wv": uni(keys[4], (M, M)), "bv": uni(keys[5], (M,)),
        "wo": uni(keys[6], (M, M)), "bo": uni(keys[7], (M,)),
        "ln_w": jnp.ones((M,), jnp.float32),   # LayerNorm default weight
        "ln_b": jnp.zeros((M,), jnp.float32),  # LayerNorm default bias
    }
    x = jax.random.normal(keys[8], (B, L, M), jnp.float32)

    packed = pack_params(params, H)            # packing / scaling / bf16 cast: once
    out = multi_head_attention(x, packed, H)
    out = jax.block_until_ready(out)

    ref = reference(x, params, H)
    assert out.shape == (B, L, M)
    # Softmax is exact f32 now; tolerance only reflects bf16 matmul inputs
    # (f32 accumulation) versus the pure-f32 reference.
    assert jnp.allclose(out, ref, rtol=3e-2, atol=3e-2), "mismatch vs reference"

    print("KERNEL_OK")
</pallas_src>

<mosaic_0001>
module attributes {stable_mosaic.version = 11 : i64} {
  func.func @mha_fused_kernel(%arg0: i32, %arg1: memref<16x32xf32, #tpu.memory_space<vmem>>, %arg2: memref<32x96xbf16, #tpu.memory_space<vmem>>, %arg3: memref<1x96xf32, #tpu.memory_space<vmem>>, %arg4: memref<64x1xi32, #tpu.memory_space<vmem>>, %arg5: memref<1x64xi32, #tpu.memory_space<vmem>>, %arg6: memref<32x32xbf16, #tpu.memory_space<vmem>>, %arg7: memref<1x32xf32, #tpu.memory_space<vmem>>, %arg8: memref<1x32xf32, #tpu.memory_space<vmem>>, %arg9: memref<1x32xf32, #tpu.memory_space<vmem>>, %arg10: memref<16x32xf32, #tpu.memory_space<vmem>>, %arg11: memref<16x32xf32, #tpu.memory_space<vmem>>) attributes {dimension_semantics = [#tpu.dimension_semantics<arbitrary>], iteration_bounds = array<i64: 1>, scalar_prefetch = 0 : i64, scratch_operands = 1 : i64, tpu.core_type = #tpu.core_type<tc>, window_params = [{pipeline_mode = #tpu.pipeline_mode<synchronous>, transform_indices = @transform_0, window_bounds = array<i64: 16, 32>}, {pipeline_mode = #tpu.pipeline_mode<synchronous>, transform_indices = @transform_1, window_bounds = array<i64: 32, 96>}, {pipeline_mode = #tpu.pipeline_mode<synchronous>, transform_indices = @transform_2, window_bounds = array<i64: 1, 96>}, {pipeline_mode = #tpu.pipeline_mode<synchronous>, transform_indices = @transform_3, window_bounds = array<i64: 64, 1>}, {pipeline_mode = #tpu.pipeline_mode<synchronous>, transform_indices = @transform_4, window_bounds = array<i64: 1, 64>}, {pipeline_mode = #tpu.pipeline_mode<synchronous>, transform_indices = @transform_5, window_bounds = array<i64: 32, 32>}, {pipeline_mode = #tpu.pipeline_mode<synchronous>, transform_indices = @transform_6, window_bounds = array<i64: 1, 32>}, {pipeline_mode = #tpu.pipeline_mode<synchronous>, transform_indices = @transform_7, window_bounds = array<i64: 1, 32>}, {pipeline_mode = #tpu.pipeline_mode<synchronous>, transform_indices = @transform_8, window_bounds = array<i64: 1, 32>}, {pipeline_mode = #tpu.pipeline_mode<synchronous>, transform_indices = @transform_9, window_bounds = array<i64: 16, 32>}]} {
    %c0 = arith.constant 0 : index
    %c0_0 = arith.constant 0 : index
    %0 = vector.load %arg1[%c0, %c0_0] : memref<16x32xf32, #tpu.memory_space<vmem>>, vector<16x32xf32>
    %1 = arith.truncf %0 : vector<16x32xf32> to vector<16x32xbf16>
    %c0_1 = arith.constant 0 : index
    %c0_2 = arith.constant 0 : index
    %2 = vector.load %arg2[%c0_1, %c0_2] : memref<32x96xbf16, #tpu.memory_space<vmem>>, vector<32x96xbf16>
    %cst = arith.constant dense<0.000000e+00> : vector<16x96xf32>
    %3 = tpu.matmul %1, %2, %cst {dimension_numbers = #tpu.dot_dimension_numbers<[1], [0], [0], [1], [0, 0, 1, 1], [], []>} : vector<16x32xbf16>, vector<32x96xbf16>, vector<16x96xf32> -> vector<16x96xf32>
    %c0_3 = arith.constant 0 : index
    %c0_4 = arith.constant 0 : index
    %4 = vector.load %arg3[%c0_3, %c0_4] : memref<1x96xf32, #tpu.memory_space<vmem>>, vector<1x96xf32>
    %5 = vector.broadcast %4 : vector<1x96xf32> to vector<16x96xf32>
    %6 = arith.addf %3, %5 : vector<16x96xf32>
    %7 = vector.extract_strided_slice %6 {offsets = [0, 0], sizes = [16, 8], strides = [1, 1]} : vector<16x96xf32> to vector<16x8xf32>
    %8 = vector.extract_strided_slice %6 {offsets = [0, 8], sizes = [16, 8], strides = [1, 1]} : vector<16x96xf32> to vector<16x8xf32>
    %9 = vector.extract_strided_slice %6 {offsets = [0, 16], sizes = [16, 8], strides = [1, 1]} : vector<16x96xf32> to vector<16x8xf32>
    %10 = vector.extract_strided_slice %6 {offsets = [0, 24], sizes = [16, 8], strides = [1, 1]} : vector<16x96xf32> to vector<16x8xf32>
    %11 = tpu.concatenate %7, %8, %9, %10 in 0 : vector<16x8xf32>, vector<16x8xf32>, vector<16x8xf32>, vector<16x8xf32> -> vector<64x8xf32>
    %12 = arith.truncf %11 : vector<64x8xf32> to vector<64x8xbf16>
    %13 = vector.extract_strided_slice %6 {offsets = [0, 32], sizes = [16, 8], strides = [1, 1]} : vector<16x96xf32> to vector<16x8xf32>
    %14 = vector.extract_strided_slice %6 {offsets = [0, 40], sizes = [16, 8], strides = [1, 1]} : vector<16x96xf32> to vector<16x8xf32>
    %15 = vector.extract_strided_slice %6 {offsets = [0, 48], sizes = [16, 8], strides = [1, 1]} : vector<16x96xf32> to vector<16x8xf32>
    %16 = vector.extract_strided_slice %6 {offsets = [0, 56], sizes = [16, 8], strides = [1, 1]} : vector<16x96xf32> to vector<16x8xf32>
    %17 = tpu.concatenate %13, %14, %15, %16 in 0 : vector<16x8xf32>, vector<16x8xf32>, vector<16x8xf32>, vector<16x8xf32> -> vector<64x8xf32>
    %18 = arith.truncf %17 : vector<64x8xf32> to vector<64x8xbf16>
    %19 = vector.extract_strided_slice %6 {offsets = [0, 64], sizes = [16, 8], strides = [1, 1]} : vector<16x96xf32> to vector<16x8xf32>
    %20 = vector.extract_strided_slice %6 {offsets = [0, 72], sizes = [16, 8], strides = [1, 1]} : vector<16x96xf32> to vector<16x8xf32>
    %21 = vector.extract_strided_slice %6 {offsets = [0, 80], sizes = [16, 8], strides = [1, 1]} : vector<16x96xf32> to vector<16x8xf32>
    %22 = vector.extract_strided_slice %6 {offsets = [0, 88], sizes = [16, 8], strides = [1, 1]} : vector<16x96xf32> to vector<16x8xf32>
    %23 = tpu.concatenate %19, %20, %21, %22 in 0 : vector<16x8xf32>, vector<16x8xf32>, vector<16x8xf32>, vector<16x8xf32> -> vector<64x8xf32>
    %24 = arith.truncf %23 : vector<64x8xf32> to vector<64x8xbf16>
    %cst_5 = arith.constant dense<0.000000e+00> : vector<64x64xf32>
    %25 = tpu.matmul %12, %18, %cst_5 {dimension_numbers = #tpu.dot_dimension_numbers<[1], [1], [0], [0], [0, 0, 1, 0], [], []>} : vector<64x8xbf16>, vector<64x8xbf16>, vector<64x64xf32> -> vector<64x64xf32>
    %c0_6 = arith.constant 0 : index
    %c0_7 = arith.constant 0 : index
    %26 = vector.load %arg4[%c0_6, %c0_7] : memref<64x1xi32, #tpu.memory_space<vmem>>, vector<64x1xi32>
    %c0_8 = arith.constant 0 : index
    %c0_9 = arith.constant 0 : index
    %27 = vector.load %arg5[%c0_8, %c0_9] : memref<1x64xi32, #tpu.memory_space<vmem>>, vector<1x64xi32>
    %28 = vector.broadcast %26 : vector<64x1xi32> to vector<64x64xi32>
    %29 = vector.broadcast %27 : vector<1x64xi32> to vector<64x64xi32>
    %30 = arith.cmpi eq, %28, %29 : vector<64x64xi32>
    %cst_10 = arith.constant -1.000000e+30 : f32
    %31 = vector.broadcast %cst_10 : f32 to vector<64x64xf32>
    %32 = arith.select %30, %25, %31 : vector<64x64xi1>, vector<64x64xf32>
    %cst_11 = arith.constant dense<0xFF800000> : vector<64xf32>
    %33 = vector.multi_reduction <maximumf>, %32, %cst_11 [1] : vector<64x64xf32> to vector<64xf32>
    %34 = vector.shape_cast %33 : vector<64xf32> to vector<64x1xf32>
    %35 = vector.broadcast %34 : vector<64x1xf32> to vector<64x64xf32>
    %36 = arith.subf %32, %35 : vector<64x64xf32>
    %37 = math.exp %36 : vector<64x64xf32>
    %cst_12 = arith.constant dense<0.000000e+00> : vector<64xf32>
    %38 = vector.multi_reduction <add>, %37, %cst_12 [1] : vector<64x64xf32> to vector<64xf32>
    %39 = vector.shape_cast %38 : vector<64xf32> to vector<64x1xf32>
    %40 = vector.broadcast %39 : vector<64x1xf32> to vector<64x64xf32>
    %41 = arith.divf %37, %40 : vector<64x64xf32>
    %42 = arith.truncf %41 : vector<64x64xf32> to vector<64x64xbf16>
    %cst_13 = arith.constant dense<0.000000e+00> : vector<64x8xf32>
    %43 = tpu.matmul %42, %24, %cst_13 {dimension_numbers = #tpu.dot_dimension_numbers<[1], [0], [0], [1], [0, 0, 1, 1], [], []>} : vector<64x64xbf16>, vector<64x8xbf16>, vector<64x8xf32> -> vector<64x8xf32>
    %44 = vector.extract_strided_slice %43 {offsets = [0, 0], sizes = [16, 8], strides = [1, 1]} : vector<64x8xf32> to vector<16x8xf32>
    %c0_14 = arith.constant 0 : index
    %c0_15 = arith.constant 0 : index
    %45 = vector.load %arg11[%c0_14, %c0_15] : memref<16x32xf32, #tpu.memory_space<vmem>>, vector<16x8xf32>
    tpu.vector_store %arg11[%c0_14, %c0_15], %44 {strides = array<i32>} : memref<16x32xf32, #tpu.memory_space<vmem>>, vector<16x8xf32>,
    %46 = vector.extract_strided_slice %43 {offsets = [16, 0], sizes = [16, 8], strides = [1, 1]} : vector<64x8xf32> to vector<16x8xf32>
    %c0_16 = arith.constant 0 : index
    %c8 = arith.constant 8 : index
    %47 = vector.load %arg11[%c0_16, %c8] : memref<16x32xf32, #tpu.memory_space<vmem>>, vector<16x8xf32>
    tpu.vector_store %arg11[%c0_16, %c8], %46 {strides = array<i32>} : memref<16x32xf32, #tpu.memory_space<vmem>>, vector<16x8xf32>,
    %48 = vector.extract_strided_slice %43 {offsets = [32, 0], sizes = [16, 8], strides = [1, 1]} : vector<64x8xf32> to vector<16x8xf32>
    %c0_17 = arith.constant 0 : index
    %c16 = arith.constant 16 : index
    %49 = vector.load %arg11[%c0_17, %c16] : memref<16x32xf32, #tpu.memory_space<vmem>>, vector<16x8xf32>
    tpu.vector_store %arg11[%c0_17, %c16], %48 {strides = array<i32>} : memref<16x32xf32, #tpu.memory_space<vmem>>, vector<16x8xf32>,
    %50 = vector.extract_strided_slice %43 {offsets = [48, 0], sizes = [16, 8], strides = [1, 1]} : vector<64x8xf32> to vector<16x8xf32>
    %c0_18 = arith.constant 0 : index
    %c24 = arith.constant 24 : index
    %51 = vector.load %arg11[%c0_18, %c24] : memref<16x32xf32, #tpu.memory_space<vmem>>, vector<16x8xf32>
    tpu.vector_store %arg11[%c0_18, %c24], %50 {strides = array<i32>} : memref<16x32xf32, #tpu.memory_space<vmem>>, vector<16x8xf32>,
    %c0_19 = arith.constant 0 : index
    %c0_20 = arith.constant 0 : index
    %52 = vector.load %arg11[%c0_19, %c0_20] : memref<16x32xf32, #tpu.memory_space<vmem>>, vector<16x32xf32>
    %53 = arith.truncf %52 : vector<16x32xf32> to vector<16x32xbf16>
    %c0_21 = arith.constant 0 : index
    %c0_22 = arith.constant 0 : index
    %54 = vector.load %arg6[%c0_21, %c0_22] : memref<32x32xbf16, #tpu.memory_space<vmem>>, vector<32x32xbf16>
    %cst_23 = arith.constant dense<0.000000e+00> : vector<16x32xf32>
    %55 = tpu.matmul %53, %54, %cst_23 {dimension_numbers = #tpu.dot_dimension_numbers<[1], [0], [0], [1], [0, 0, 1, 1], [], []>} : vector<16x32xbf16>, vector<32x32xbf16>, vector<16x32xf32> -> vector<16x32xf32>
    %c0_24 = arith.constant 0 : index
    %c0_25 = arith.constant 0 : index
    %56 = vector.load %arg7[%c0_24, %c0_25] : memref<1x32xf32, #tpu.memory_space<vmem>>, vector<1x32xf32>
    %57 = vector.broadcast %56 : vector<1x32xf32> to vector<16x32xf32>
    %58 = arith.addf %55, %57 : vector<16x32xf32>
    %59 = arith.addf %58, %0 : vector<16x32xf32>
    %cst_26 = arith.constant dense<0.000000e+00> : vector<16xf32>
    %60 = vector.multi_reduction <add>, %59, %cst_26 [1] : vector<16x32xf32> to vector<16xf32>
    %61 = vector.shape_cast %60 : vector<16xf32> to vector<16x1xf32>
    %cst_27 = arith.constant 3.200000e+01 : f32
    %62 = vector.broadcast %cst_27 : f32 to vector<16x1xf32>
    %63 = arith.divf %61, %62 : vector<16x1xf32>
    %64 = vector.broadcast %63 : vector<16x1xf32> to vector<16x32xf32>
    %65 = arith.subf %59, %64 : vector<16x32xf32>
    %66 = arith.mulf %65, %65 : vector<16x32xf32>
    %cst_28 = arith.constant dense<0.000000e+00> : vector<16xf32>
    %67 = vector.multi_reduction <add>, %66, %cst_28 [1] : vector<16x32xf32> to vector<16xf32>
    %68 = vector.shape_cast %67 : vector<16xf32> to vector<16x1xf32>
    %cst_29 = arith.constant 3.200000e+01 : f32
    %69 = vector.broadcast %cst_29 : f32 to vector<16x1xf32>
    %70 = arith.divf %68, %69 : vector<16x1xf32>
    %cst_30 = arith.constant 9.99999974E-6 : f32
    %71 = vector.broadcast %cst_30 : f32 to vector<16x1xf32>
    %72 = arith.addf %70, %71 : vector<16x1xf32>
    %73 = math.rsqrt %72 : vector<16x1xf32>
    %74 = vector.broadcast %73 : vector<16x1xf32> to vector<16x32xf32>
    %75 = arith.mulf %65, %74 : vector<16x32xf32>
    %c0_31 = arith.constant 0 : index
    %c0_32 = arith.constant 0 : index
    %76 = vector.load %arg8[%c0_31, %c0_32] : memref<1x32xf32, #tpu.memory_space<vmem>>, vector<1x32xf32>
    %77 = vector.broadcast %76 : vector<1x32xf32> to vector<16x32xf32>
    %78 = arith.mulf %75, %77 : vector<16x32xf32>
    %c0_33 = arith.constant 0 : index
    %c0_34 = arith.constant 0 : index
    %79 = vector.load %arg9[%c0_33, %c0_34] : memref<1x32xf32, #tpu.memory_space<vmem>>, vector<1x32xf32>
    %80 = vector.broadcast %79 : vector<1x32xf32> to vector<16x32xf32>
    %81 = arith.addf %78, %80 : vector<16x32xf32>
    %c0_35 = arith.constant 0 : index
    %c0_36 = arith.constant 0 : index
    %82 = vector.load %arg10[%c0_35, %c0_36] : memref<16x32xf32, #tpu.memory_space<vmem>>, vector<16x32xf32>
    tpu.vector_store %arg10[%c0_35, %c0_36], %81 {strides = array<i32>} : memref<16x32xf32, #tpu.memory_space<vmem>>, vector<16x32xf32>,
    return
  }
  func.func @transform_0(%arg0: i32) -> (i32, i32) {
    %c0_i32 = arith.constant 0 : i32
    %c0_i32_0 = arith.constant 0 : i32
    %c0_i32_1 = arith.constant 0 : i32
    return %c0_i32, %c0_i32_0 : i32, i32
  }
  func.func @transform_1(%arg0: i32) -> (i32, i32) {
    %c0_i32 = arith.constant 0 : i32
    %c0_i32_0 = arith.constant 0 : i32
    %c0_i32_1 = arith.constant 0 : i32
    return %c0_i32, %c0_i32_0 : i32, i32
  }
  func.func @transform_2(%arg0: i32) -> (i32, i32) {
    %c0_i32 = arith.constant 0 : i32
    %c0_i32_0 = arith.constant 0 : i32
    %c0_i32_1 = arith.constant 0 : i32
    return %c0_i32, %c0_i32_0 : i32, i32
  }
  func.func @transform_3(%arg0: i32) -> (i32, i32) {
    %c0_i32 = arith.constant 0 : i32
    %c0_i32_0 = arith.constant 0 : i32
    %c0_i32_1 = arith.constant 0 : i32
    return %c0_i32, %c0_i32_0 : i32, i32
  }
  func.func @transform_4(%arg0: i32) -> (i32, i32) {
    %c0_i32 = arith.constant 0 : i32
    %c0_i32_0 = arith.constant 0 : i32
    %c0_i32_1 = arith.constant 0 : i32
    return %c0_i32, %c0_i32_0 : i32, i32
  }
  func.func @transform_5(%arg0: i32) -> (i32, i32) {
    %c0_i32 = arith.constant 0 : i32
    %c0_i32_0 = arith.constant 0 : i32
    %c0_i32_1 = arith.constant 0 : i32
    return %c0_i32, %c0_i32_0 : i32, i32
  }
  func.func @transform_6(%arg0: i32) -> (i32, i32) {
    %c0_i32 = arith.constant 0 : i32
    %c0_i32_0 = arith.constant 0 : i32
    %c0_i32_1 = arith.constant 0 : i32
    return %c0_i32, %c0_i32_0 : i32, i32
  }
  func.func @transform_7(%arg0: i32) -> (i32, i32) {
    %c0_i32 = arith.constant 0 : i32
    %c0_i32_0 = arith.constant 0 : i32
    %c0_i32_1 = arith.constant 0 : i32
    return %c0_i32, %c0_i32_0 : i32, i32
  }
  func.func @transform_8(%arg0: i32) -> (i32, i32) {
    %c0_i32 = arith.constant 0 : i32
    %c0_i32_0 = arith.constant 0 : i32
    %c0_i32_1 = arith.constant 0 : i32
    return %c0_i32, %c0_i32_0 : i32, i32
  }
  func.func @transform_9(%arg0: i32) -> (i32, i32) {
    %c0_i32 = arith.constant 0 : i32
    %c0_i32_0 = arith.constant 0 : i32
    %c0_i32_1 = arith.constant 0 : i32
    return %c0_i32, %c0_i32_0 : i32, i32
  }
}

</mosaic_0001>

<llo_original>
// kernel: tpu_custom_call.1
$region0: #{tpu_custom_call.1}
  #allocation0 [shape = 'u32[]', space=smem, size = 0x4, offset = 0x4, fixed_abs, tag = 'smem constant byte address 0x4 - core index']
  #allocation1 [shape = 'u32[144,128]{1,0:T(1,128)}', space=vmem, size = 0x12000, scoped, tag = 'internal scratch']
  #allocation2 [shape = 'f32[16,32]{1,0:T(8,128)}', space=vmem, size = 0x2000, scoped, tag = 'scratch operand']
  %s0 = inlined_call_operand.vmem [shape: f32[16,32], index: 0, kind: input, shape index: {}]
  %s1 = inlined_call_operand.vmem [shape: bf16[32,96], index: 1, kind: input, shape index: {}]
  %s2 = inlined_call_operand.vmem [shape: f32[1,96], index: 2, kind: input, shape index: {}]
  %s3 = inlined_call_operand.vmem [shape: s32[64,1], index: 3, kind: input, shape index: {}]
  %s4 = inlined_call_operand.vmem [shape: s32[1,64], index: 4, kind: input, shape index: {}]
  %s5 = inlined_call_operand.vmem [shape: bf16[32,32], index: 5, kind: input, shape index: {}]
  %s6 = inlined_call_operand.vmem [shape: f32[1,32], index: 6, kind: input, shape index: {}]
  %s7 = inlined_call_operand.vmem [shape: f32[1,32], index: 7, kind: input, shape index: {}]
  %s8 = inlined_call_operand.vmem [shape: f32[1,32], index: 8, kind: input, shape index: {}]
  %s9 = inlined_call_operand.hbm [shape: f32[16,32], index: 9, kind: output, shape index: {}]
  %s10 = sld [smem:[#allocation0]]
  $region46: #{tpu_custom_call.1} parent=0
    _
  %s12 = ssub.s32 1, %s10
  %s13 = scalar_select 0, %s12, %s10
  $region1: #{tpu_custom_call.1} parent=0
    #allocation3 [shape = 'u8[8192]{0}', space=vmem, size = 0x2000, scoped, tag = 'output window, operand 0, single buffered']
    #allocation4 [shape = 's32[1]{0}', space=sflag, size = 0x4, scoped, tag = 'scoped memory for tpu_custom_call.1']
    %14 = vsyncpa [#allocation4], 0
    // Predicated region
    $region2: #{tpu_custom_call.1} parent=1 // pred_check
      _
    $region3: #{tpu_custom_call.1} parent=1 // pred_check_branch
      %16 = sbr.rel (0) target = $region5
    $region4: #{tpu_custom_call.1} parent=1 // pred_region
      _
    $region5: #{tpu_custom_call.1} parent=1 // pred_fallthru
      _
    // Predicated region
    $region6: #{tpu_custom_call.1} parent=1 // pred_check
      _
    $region7: #{tpu_custom_call.1} parent=1 // pred_check_branch
      %18 = sbr.rel (0) target = $region9
    $region8: #{tpu_custom_call.1} parent=1 // pred_region
      _
    $region9: #{tpu_custom_call.1} parent=1 // pred_fallthru
      _
    // Predicated region
    $region10: #{tpu_custom_call.1} parent=1 // pred_check
      _
    $region11: #{tpu_custom_call.1} parent=1 // pred_check_branch
      %20 = sbr.rel (0) target = $region13
    $region12: #{tpu_custom_call.1} parent=1 // pred_region
      _
    $region13: #{tpu_custom_call.1} parent=1 // pred_fallthru
      _
    // Predicated region
    $region14: #{tpu_custom_call.1} parent=1 // pred_check
      _
    $region15: #{tpu_custom_call.1} parent=1 // pred_check_branch
      %22 = sbr.rel (0) target = $region17
    $region16: #{tpu_custom_call.1} parent=1 // pred_region
      _
    $region17: #{tpu_custom_call.1} parent=1 // pred_fallthru
      _
    // Predicated region
    $region18: #{tpu_custom_call.1} parent=1 // pred_check
      _
    $region19: #{tpu_custom_call.1} parent=1 // pred_check_branch
      %24 = sbr.rel (0) target = $region21
    $region20: #{tpu_custom_call.1} parent=1 // pred_region
      _
    $region21: #{tpu_custom_call.1} parent=1 // pred_fallthru
      _
    // Predicated region
    $region22: #{tpu_custom_call.1} parent=1 // pred_check
      _
    $region23: #{tpu_custom_call.1} parent=1 // pred_check_branch
      %26 = sbr.rel (0) target = $region25
    $region24: #{tpu_custom_call.1} parent=1 // pred_region
      _
    $region25: #{tpu_custom_call.1} parent=1 // pred_fallthru
      _
    // Predicated region
    $region26: #{tpu_custom_call.1} parent=1 // pred_check
      _
    $region27: #{tpu_custom_call.1} parent=1 // pred_check_branch
      %28 = sbr.rel (0) target = $region29
    $region28: #{tpu_custom_call.1} parent=1 // pred_region
      _
    $region29: #{tpu_custom_call.1} parent=1 // pred_fallthru
      _
    // Predicated region
    $region30: #{tpu_custom_call.1} parent=1 // pred_check
      _
    $region31: #{tpu_custom_call.1} parent=1 // pred_check_branch
      %30 = sbr.rel (0) target = $region33
    $region32: #{tpu_custom_call.1} parent=1 // pred_region
      _
    $region33: #{tpu_custom_call.1} parent=1 // pred_fallthru
      _
    // Predicated region
    $region34: #{tpu_custom_call.1} parent=1 // pred_check
      _
    $region35: #{tpu_custom_call.1} parent=1 // pred_check_branch
      %32 = sbr.rel (0) target = $region37
    $region36: #{tpu_custom_call.1} parent=1 // pred_region
      _
    $region37: #{tpu_custom_call.1} parent=1 // pred_fallthru
      _
    %v34 = vld [vmem:[%s0] sm:$0xff]
    %v35 = vld [vmem:[%s0 + $0x8] sm:$0xff]
    %v36 = vpack.c.bf16 %v35, %v34
    %v37 = vld [vmem:[%s1] sm:$0xf]
    %v38 = vld [vmem:[%s1 + $0x4] sm:$0xf]
    %v39 = vld [vmem:[%s1 + $0x8] sm:$0xf]
    %v40 = vld [vmem:[%s1 + $0xc] sm:$0xf]
    %v41 = vld [vmem:[%s2] sm:$0x1]
    %v43 = vlaneseq
    %v44 = vshrl.u32 %v43, 7
    %v45 = vsub.s32 0, %v44
    %v46 = vrot.slane %v41, %v45
    %v52 = vunpack.c.l.b16 %v37
    %v53 = vunpack.c.l.b16 %v38
    %v54 = vunpack.c.l.b16 %v39
    %v55 = vunpack.c.l.b16 %v40
    %v56 = vpack.c.b16 %v53, %v52
    %v57 = vpack.c.b16 %v55, %v54
    %vm60 = vcmask 261120
    %v62 = vsel %vm60, %v36, 0
    %64 = vmatprep.subr.bf16.mxu0 0
    %65 = vmatpush1.bf16.msra.mxu0 0
    %66 = vmatprep.subr.bf16.mxu0 0
    %67 = vmatpush1.bf16.msra.mxu0 0
    %68 = vmatprep.subr.bf16.mxu0 0
    %69 = vmatpush1.bf16.msra.mxu0 0
    %70 = vmatprep.subr.bf16.mxu0 0
    %71 = vmatpush1.bf16.msra.mxu0 0
    %72 = vmatprep.subr.bf16.mxu0 0
    %73 = vmatpush1.bf16.msra.mxu0 0
    %74 = vmatprep.subr.bf16.mxu0 0
    %75 = vmatpush1.bf16.msra.mxu0 0
    %76 = vmatprep.subr.bf16.mxu0 0
    %77 = vmatpush1.bf16.msra.mxu0 %v57
    %78 = vmatprep.subr.bf16.mxu0 0
    %79 = vmatpush1.bf16.msra.mxu0 %v56
    %80 = vmatprep.subr.bf16.mxu0 0
    %81 = vmatpush2.bf16.msra.mxu0 0
    %82 = vmatprep.subr.bf16.mxu0 0
    %83 = vmatpush2.bf16.msra.mxu0 0
    %84 = vmatprep.subr.bf16.mxu0 0
    %85 = vmatpush2.bf16.msra.mxu0 0
    %86 = vmatprep.subr.bf16.mxu0 0
    %87 = vmatpush2.bf16.msra.mxu0 0
    %88 = vmatprep.subr.bf16.mxu0 0
    %89 = vmatpush2.bf16.msra.mxu0 0
    %90 = vmatprep.subr.bf16.mxu0 0
    %91 = vmatpush2.bf16.msra.mxu0 0
    %92 = vmatprep.subr.bf16.mxu0 0
    %93 = vmatpush2.bf16.msra.mxu0 0
    %94 = vmatprep.subr.bf16.mxu0 0
    %95 = vmatpush2.bf16.msra.mxu0 0
    %96 = vmatprep.mubr.bf16.mxu0 0
    %97 = vmatmul.mubr.bf16.gmra.mxu0 %v62
    %v98 = vpop.f32.mrf.mxu0
    %v99 = vadd.f32 %v46, %v98
    %v100 = vpop.f32.mrf.mxu0
    %v101 = vpop.f32.mrf.mxu0
    %v102 = vadd.f32 %v46, %v101
    %v103 = vpop.f32.mrf.mxu0
    %104 = vdwg.mxu0
    %107 = vrot.lane.b32.xlu0 %v99, 120
    %v108 = vpop.permute.xlu0 %107
    %109 = vrot.lane.b32.xlu0 %v102, 120
    %v110 = vpop.permute.xlu0 %109
    %113 = vrot.lane.b32.xlu0 %v99, 112
    %v114 = vpop.permute.xlu0 %113
    %115 = vrot.lane.b32.xlu0 %v102, 112
    %v116 = vpop.permute.xlu0 %115
    %119 = vrot.lane.b32.xlu0 %v99, 104
    %v120 = vpop.permute.xlu0 %119
    %121 = vrot.lane.b32.xlu0 %v102, 104
    %v122 = vpop.permute.xlu0 %121
    %v125 = vpack.c.bf16 %v102, %v99
    %v126 = vpack.c.bf16 %v110, %v108
    %v127 = vpack.c.bf16 %v116, %v114
    %v128 = vpack.c.bf16 %v122, %v120
    %133 = vrot.lane.b32.xlu0 %v125, 96
    %v134 = vpop.permute.xlu0 %133
    %135 = vrot.lane.b32.xlu0 %v126, 96
    %v136 = vpop.permute.xlu0 %135
    %137 = vrot.lane.b32.xlu0 %v127, 96
    %v138 = vpop.permute.xlu0 %137
    %139 = vrot.lane.b32.xlu0 %v128, 96
    %v140 = vpop.permute.xlu0 %139
    %vm141 = vcmask 64512
    %v143 = vsel %vm141, %v125, 0
    %v146 = vsel %vm141, %v126, 0
    %v149 = vsel %vm141, %v127, 0
    %v152 = vsel %vm141, %v128, 0
    %v155 = vsel %vm141, %v134, 0
    %v158 = vsel %vm141, %v136, 0
    %v161 = vsel %vm141, %v138, 0
    %v164 = vsel %vm141, %v140, 0
    %166 = vmatprep.subr.bf16.mxu0 0
    %167 = vmatpush1.bf16.xpose.msra.mxu0 0
    %168 = vmatprep.subr.bf16.mxu0 0
    %169 = vmatpush1.bf16.xpose.msra.mxu0 0
    %170 = vmatprep.subr.bf16.mxu0 0
    %171 = vmatpush1.bf16.xpose.msra.mxu0 0
    %172 = vmatprep.subr.bf16.mxu0 0
    %173 = vmatpush1.bf16.xpose.msra.mxu0 0
    %174 = vmatprep.subr.bf16.mxu0 0
    %175 = vmatpush1.bf16.xpose.msra.mxu0 %v164
    %176 = vmatprep.subr.bf16.mxu0 0
    %177 = vmatpush1.bf16.xpose.msra.mxu0 %v161
    %178 = vmatprep.subr.bf16.mxu0 0
    %179 = vmatpush1.bf16.xpose.msra.mxu0 %v158
    %180 = vmatprep.subr.bf16.mxu0 0
    %181 = vmatpush1.bf16.xpose.msra.mxu0 %v155
    %182 = vmatprep.subr.bf16.mxu0 0
    %183 = vmatpush2.bf16.xpose.msra.mxu0 0
    %184 = vmatprep.subr.bf16.mxu0 0
    %185 = vmatpush2.bf16.xpose.msra.mxu0 0
    %186 = vmatprep.subr.bf16.mxu0 0
    %187 = vmatpush2.bf16.xpose.msra.mxu0 0
    %188 = vmatprep.subr.bf16.mxu0 0
    %189 = vmatpush2.bf16.xpose.msra.mxu0 0
    %190 = vmatprep.subr.bf16.mxu0 0
    %191 = vmatpush2.bf16.xpose.msra.mxu0 0
    %192 = vmatprep.subr.bf16.mxu0 0
    %193 = vmatpush2.bf16.xpose.msra.mxu0 0
    %194 = vmatprep.subr.bf16.mxu0 0
    %195 = vmatpush2.bf16.xpose.msra.mxu0 0
    %196 = vmatprep.subr.bf16.mxu0 0
    %197 = vmatpush2.bf16.xpose.msra.mxu0 0
    %198 = vmatprep.mubr.bf16.mxu0 0
    %199 = vmatmul.mubr.bf16.gmra.mxu0 %v143
    %v200 = vpop.f32.mrf.mxu0
    %v201 = vadd.f32 0.0, %v200
    %v202 = vpop.f32.mrf.mxu0
    %v203 = vpop.f32.mrf.mxu0
    %v204 = vadd.f32 0.0, %v203
    %v205 = vpop.f32.mrf.mxu0
    %206 = vmatprep.mubr.bf16.mxu0 0
    %207 = vmatmul.mubr.bf16.gmra.mxu0 %v146
    %v208 = vpop.f32.mrf.mxu0
    %v209 = vadd.f32 0.0, %v208
    %v210 = vpop.f32.mrf.mxu0
    %v211 = vpop.f32.mrf.mxu0
    %v212 = vadd.f32 0.0, %v211
    %v213 = vpop.f32.mrf.mxu0
    %214 = vmatprep.mubr.bf16.mxu0 0
    %215 = vmatmul.mubr.bf16.gmra.mxu0 %v149
    %v216 = vpop.f32.mrf.mxu0
    %v217 = vadd.f32 0.0, %v216
    %v218 = vpop.f32.mrf.mxu0
    %v219 = vpop.f32.mrf.mxu0
    %v220 = vadd.f32 0.0, %v219
    %v221 = vpop.f32.mrf.mxu0
    %222 = vmatprep.mubr.bf16.mxu0 0
    %223 = vmatmul.mubr.bf16.gmra.mxu0 %v152
    %v224 = vpop.f32.mrf.mxu0
    %v225 = vadd.f32 0.0, %v224
    %v226 = vpop.f32.mrf.mxu0
    %v227 = vpop.f32.mrf.mxu0
    %v228 = vadd.f32 0.0, %v227
    %v229 = vpop.f32.mrf.mxu0
    %230 = vdwg.mxu0
    %v231 = vld [vmem:[%s3] sm:$0xff]
    %v232 = vld [vmem:[%s3 + $0x8] sm:$0xff]
    %v233 = vld [vmem:[%s3 + $0x10] sm:$0xff]
    %v234 = vld [vmem:[%s3 + $0x18] sm:$0xff]
    %v235 = vld [vmem:[%s3 + $0x20] sm:$0xff]
    %v236 = vld [vmem:[%s3 + $0x28] sm:$0xff]
    %v237 = vld [vmem:[%s3 + $0x30] sm:$0xff]
    %v238 = vld [vmem:[%s3 + $0x38] sm:$0xff]
    %v239 = vld [vmem:[%s4] sm:$0x1]
    %240 = vset.pattern.permute.xlu0 0
    %241 = vperm.xlu0 %240, %v231
    %v242 = vpop.permute.xlu0 %241
    %243 = vset.pattern.permute.xlu0 0
    %244 = vperm.xlu0 %243, %v232
    %v245 = vpop.permute.xlu0 %244
    %246 = vset.pattern.permute.xlu0 0
    %247 = vperm.xlu0 %246, %v233
    %v248 = vpop.permute.xlu0 %247
    %249 = vset.pattern.permute.xlu0 0
    %250 = vperm.xlu0 %249, %v234
    %v251 = vpop.permute.xlu0 %250
    %252 = vset.pattern.permute.xlu0 0
    %253 = vperm.xlu0 %252, %v235
    %v254 = vpop.permute.xlu0 %253
    %255 = vset.pattern.permute.xlu0 0
    %256 = vperm.xlu0 %255, %v236
    %v257 = vpop.permute.xlu0 %256
    %258 = vset.pattern.permute.xlu0 0
    %259 = vperm.xlu0 %258, %v237
    %v260 = vpop.permute.xlu0 %259
    %261 = vset.pattern.permute.xlu0 0
    %262 = vperm.xlu0 %261, %v238
    %v263 = vpop.permute.xlu0 %262
    %v264 = vlaneseq
    %v265 = vshrl.u32 %v264, 7
    %v266 = vsub.s32 0, %v265
    %v267 = vrot.slane %v239, %v266
    %vm268 = vcmp.eq.s32.totalorder %v242, %v267
    %vm269 = vcmp.eq.s32.totalorder %v245, %v267
    %vm270 = vcmp.eq.s32.totalorder %v248, %v267
    %vm271 = vcmp.eq.s32.totalorder %v251, %v267
    %vm272 = vcmp.eq.s32.totalorder %v254, %v267
    %vm273 = vcmp.eq.s32.totalorder %v257, %v267
    %vm274 = vcmp.eq.s32.totalorder %v260, %v267
    %vm275 = vcmp.eq.s32.totalorder %v263, %v267
    %v276 = vsel %vm268, %v201, -1e+30
    %v277 = vsel %vm269, %v204, -1e+30
    %v278 = vsel %vm270, %v209, -1e+30
    %v279 = vsel %vm271, %v212, -1e+30
    %v280 = vsel %vm272, %v217, -1e+30
    %v281 = vsel %vm273, %v220, -1e+30
    %v282 = vsel %vm274, %v225, -1e+30
    %v283 = vsel %vm275, %v228, -1e+30
    %vm284 = vcmask 523264
    %v285 = vsel %vm284, %v276, -inf
    %286 = vmax.xlane.f32.xlu0 %v285
    %v287 = vpop.xlane.xlu0 %286
    %v288 = vsel %vm284, %v277, -inf
    %289 = vmax.xlane.f32.xlu0 %v288
    %v290 = vpop.xlane.xlu0 %289
    %v291 = vsel %vm284, %v278, -inf
    %292 = vmax.xlane.f32.xlu0 %v291
    %v293 = vpop.xlane.xlu0 %292
    %v294 = vsel %vm284, %v279, -inf
    %295 = vmax.xlane.f32.xlu0 %v294
    %v296 = vpop.xlane.xlu0 %295
    %v297 = vsel %vm284, %v280, -inf
    %298 = vmax.xlane.f32.xlu0 %v297
    %v299 = vpop.xlane.xlu0 %298
    %v300 = vsel %vm284, %v281, -inf
    %301 = vmax.xlane.f32.xlu0 %v300
    %v302 = vpop.xlane.xlu0 %301
    %v303 = vsel %vm284, %v282, -inf
    %304 = vmax.xlane.f32.xlu0 %v303
    %v305 = vpop.xlane.xlu0 %304
    %v306 = vsel %vm284, %v283, -inf
    %307 = vmax.xlane.f32.xlu0 %v306
    %v308 = vpop.xlane.xlu0 %307
    %v309 = vsub.f32 %v276, %v287
    %v310 = vsub.f32 %v277, %v290
    %v311 = vsub.f32 %v278, %v293
    %v312 = vsub.f32 %v279, %v296
    %v313 = vsub.f32 %v280, %v299
    %v314 = vsub.f32 %v281, %v302
    %v315 = vsub.f32 %v282, %v305
    %v316 = vsub.f32 %v283, %v308
    %v317 = vmul.f32 %v309, 1.442695
    %v318 = vpow.pop %v317
    %v319 = vmul.f32 %v310, 1.442695
    %v320 = vpow.pop %v319
    %v321 = vmul.f32 %v311, 1.442695
    %v322 = vpow.pop %v321
    %v323 = vmul.f32 %v312, 1.442695
    %v324 = vpow.pop %v323
    %v325 = vmul.f32 %v313, 1.442695
    %v326 = vpow.pop %v325
    %v327 = vmul.f32 %v314, 1.442695
    %v328 = vpow.pop %v327
    %v329 = vmul.f32 %v315, 1.442695
    %v330 = vpow.pop %v329
    %v331 = vmul.f32 %v316, 1.442695
    %v332 = vpow.pop %v331
    %v333 = vsel %vm284, %v318, 0.0
    %334 = vadd.xlane.f32.xlu0 %v333
    %v335 = vpop.xlane.xlu0 %334
    %v336 = vsel %vm284, %v320, 0.0
    %337 = vadd.xlane.f32.xlu0 %v336
    %v338 = vpop.xlane.xlu0 %337
    %v339 = vsel %vm284, %v322, 0.0
    %340 = vadd.xlane.f32.xlu0 %v339
    %v341 = vpop.xlane.xlu0 %340
    %v342 = vsel %vm284, %v324, 0.0
    %343 = vadd.xlane.f32.xlu0 %v342
    %v344 = vpop.xlane.xlu0 %343
    %v345 = vsel %vm284, %v326, 0.0
    %346 = vadd.xlane.f32.xlu0 %v345
    %v347 = vpop.xlane.xlu0 %346
    %v348 = vsel %vm284, %v328, 0.0
    %349 = vadd.xlane.f32.xlu0 %v348
    %v350 = vpop.xlane.xlu0 %349
    %v351 = vsel %vm284, %v330, 0.0
    %352 = vadd.xlane.f32.xlu0 %v351
    %v353 = vpop.xlane.xlu0 %352
    %v354 = vsel %vm284, %v332, 0.0
    %355 = vadd.xlane.f32.xlu0 %v354
    %v356 = vpop.xlane.xlu0 %355
    %v357 = vrcp.pop %v335
    %v358 = vmul.f32 %v318, %v357
    %v359 = vrcp.pop %v338
    %v360 = vmul.f32 %v320, %v359
    %v361 = vrcp.pop %v341
    %v362 = vmul.f32 %v322, %v361
    %v363 = vrcp.pop %v344
    %v364 = vmul.f32 %v324, %v363
    %v365 = vrcp.pop %v347
    %v366 = vmul.f32 %v326, %v365
    %v367 = vrcp.pop %v350
    %v368 = vmul.f32 %v328, %v367
    %v369 = vrcp.pop %v353
    %v370 = vmul.f32 %v330, %v369
    %v371 = vrcp.pop %v356
    %v372 = vmul.f32 %v332, %v371
    %v373 = vpack.c.bf16 %v360, %v358
    %v374 = vpack.c.bf16 %v364, %v362
    %v375 = vpack.c.bf16 %v368, %v366
    %v376 = vpack.c.bf16 %v372, %v370
    %377 = vrot.lane.b32.xlu0 %v125, 64
    %v378 = vpop.permute.xlu0 %377
    %379 = vrot.lane.b32.xlu0 %v126, 64
    %v380 = vpop.permute.xlu0 %379
    %381 = vrot.lane.b32.xlu0 %v127, 64
    %v382 = vpop.permute.xlu0 %381
    %383 = vrot.lane.b32.xlu0 %v128, 64
    %v384 = vpop.permute.xlu0 %383
    %v390 = vsel %vm284, %v373, 0
    %v393 = vsel %vm284, %v374, 0
    %v396 = vsel %vm284, %v375, 0
    %v399 = vsel %vm284, %v376, 0
    %401 = vmatprep.subr.bf16.mxu0 0
    %402 = vmatpush1.bf16.msra.mxu0 0
    %403 = vmatprep.subr.bf16.mxu0 0
    %404 = vmatpush1.bf16.msra.mxu0 0
    %405 = vmatprep.subr.bf16.mxu0 0
    %406 = vmatpush1.bf16.msra.mxu0 0
    %407 = vmatprep.subr.bf16.mxu0 0
    %408 = vmatpush1.bf16.msra.mxu0 0
    %409 = vmatprep.subr.bf16.mxu0 0
    %410 = vmatpush1.bf16.msra.mxu0 %v384
    %411 = vmatprep.subr.bf16.mxu0 0
    %412 = vmatpush1.bf16.msra.mxu0 %v382
    %413 = vmatprep.subr.bf16.mxu0 0
    %414 = vmatpush1.bf16.msra.mxu0 %v380
    %415 = vmatprep.subr.bf16.mxu0 0
    %416 = vmatpush1.bf16.msra.mxu0 %v378
    %417 = vmatprep.subr.bf16.mxu0 0
    %418 = vmatpush2.bf16.msra.mxu0 0
    %419 = vmatprep.subr.bf16.mxu0 0
    %420 = vmatpush2.bf16.msra.mxu0 0
    %421 = vmatprep.subr.bf16.mxu0 0
    %422 = vmatpush2.bf16.msra.mxu0 0
    %423 = vmatprep.subr.bf16.mxu0 0
    %424 = vmatpush2.bf16.msra.mxu0 0
    %425 = vmatprep.subr.bf16.mxu0 0
    %426 = vmatpush2.bf16.msra.mxu0 0
    %427 = vmatprep.subr.bf16.mxu0 0
    %428 = vmatpush2.bf16.msra.mxu0 0
    %429 = vmatprep.subr.bf16.mxu0 0
    %430 = vmatpush2.bf16.msra.mxu0 0
    %431 = vmatprep.subr.bf16.mxu0 0
    %432 = vmatpush2.bf16.msra.mxu0 0
    %433 = vmatprep.mubr.bf16.mxu0 0
    %434 = vmatmul.mubr.bf16.gmra.mxu0 %v390
    %v435 = vpop.f32.mrf.mxu0
    %v436 = vadd.f32 0.0, %v435
    %v437 = vpop.f32.mrf.mxu0
    %v438 = vpop.f32.mrf.mxu0
    %v439 = vadd.f32 0.0, %v438
    %v440 = vpop.f32.mrf.mxu0
    %441 = vmatprep.mubr.bf16.mxu0 0
    %442 = vmatmul.mubr.bf16.gmra.mxu0 %v393
    %v443 = vpop.f32.mrf.mxu0
    %v444 = vadd.f32 0.0, %v443
    %v445 = vpop.f32.mrf.mxu0
    %v446 = vpop.f32.mrf.mxu0
    %v447 = vadd.f32 0.0, %v446
    %v448 = vpop.f32.mrf.mxu0
    %449 = vmatprep.mubr.bf16.mxu0 0
    %450 = vmatmul.mubr.bf16.gmra.mxu0 %v396
    %v451 = vpop.f32.mrf.mxu0
    %v452 = vadd.f32 0.0, %v451
    %v453 = vpop.f32.mrf.mxu0
    %v454 = vpop.f32.mrf.mxu0
    %v455 = vadd.f32 0.0, %v454
    %v456 = vpop.f32.mrf.mxu0
    %457 = vmatprep.mubr.bf16.mxu0 0
    %458 = vmatmul.mubr.bf16.gmra.mxu0 %v399
    %v459 = vpop.f32.mrf.mxu0
    %v460 = vadd.f32 0.0, %v459
    %v461 = vpop.f32.mrf.mxu0
    %v462 = vpop.f32.mrf.mxu0
    %v463 = vadd.f32 0.0, %v462
    %v464 = vpop.f32.mrf.mxu0
    %465 = vdwg.mxu0
    %466 = vst.msk [vmem:[#allocation2] sm:$0xff] %vm141, %v436
    %467 = vst.msk [vmem:[#allocation2 + $0x8] sm:$0xff] %vm141, %v439
    %470 = vrot.lane.b32.xlu0 %v444, 8
    %v471 = vpop.permute.xlu0 %470
    %472 = vrot.lane.b32.xlu0 %v447, 8
    %v473 = vpop.permute.xlu0 %472
    %vm476 = vcmask 130112
    %477 = vst.msk [vmem:[#allocation2] sm:$0xff] %vm476, %v471
    %478 = vst.msk [vmem:[#allocation2 + $0x8] sm:$0xff] %vm476, %v473
    %481 = vrot.lane.b32.xlu0 %v452, 16
    %v482 = vpop.permute.xlu0 %481
    %483 = vrot.lane.b32.xlu0 %v455, 16
    %v484 = vpop.permute.xlu0 %483
    %vm487 = vcmask 195712
    %488 = vst.msk [vmem:[#allocation2] sm:$0xff] %vm487, %v482
    %489 = vst.msk [vmem:[#allocation2 + $0x8] sm:$0xff] %vm487, %v484
    %492 = vrot.lane.b32.xlu0 %v460, 24
    %v493 = vpop.permute.xlu0 %492
    %494 = vrot.lane.b32.xlu0 %v463, 24
    %v495 = vpop.permute.xlu0 %494
    %vm498 = vcmask 261312
    %499 = vst.msk [vmem:[#allocation2] sm:$0xff] %vm498, %v493
    %500 = vst.msk [vmem:[#allocation2 + $0x8] sm:$0xff] %vm498, %v495
    %v501 = vld [vmem:[#allocation2] sm:$0xff]
    %v502 = vld [vmem:[#allocation2 + $0x8] sm:$0xff]
    %v503 = vpack.c.bf16 %v502, %v501
    %v504 = vld [vmem:[%s5] sm:$0xf]
    %v505 = vld [vmem:[%s5 + $0x4] sm:$0xf]
    %v506 = vld [vmem:[%s5 + $0x8] sm:$0xf]
    %v507 = vld [vmem:[%s5 + $0xc] sm:$0xf]
    %v508 = vld [vmem:[%s6] sm:$0x1]
    %v510 = vlaneseq
    %v511 = vshrl.u32 %v510, 7
    %v512 = vsub.s32 0, %v511
    %v513 = vrot.slane %v508, %v512
    %v519 = vunpack.c.l.b16 %v504
    %v520 = vunpack.c.l.b16 %v505
    %v521 = vunpack.c.l.b16 %v506
    %v522 = vunpack.c.l.b16 %v507
    %v523 = vpack.c.b16 %v520, %v519
    %v524 = vpack.c.b16 %v522, %v521
    %v528 = vsel %vm60, %v503, 0
    %530 = vmatprep.subr.bf16.mxu0 0
    %531 = vmatpush1.bf16.msra.mxu0 0
    %532 = vmatprep.subr.bf16.mxu0 0
    %533 = vmatpush1.bf16.msra.mxu0 0
    %534 = vmatprep.subr.bf16.mxu0 0
    %535 = vmatpush1.bf16.msra.mxu0 0
    %536 = vmatprep.subr.bf16.mxu0 0
    %537 = vmatpush1.bf16.msra.mxu0 0
    %538 = vmatprep.subr.bf16.mxu0 0
    %539 = vmatpush1.bf16.msra.mxu0 0
    %540 = vmatprep.subr.bf16.mxu0 0
    %541 = vmatpush1.bf16.msra.mxu0 0
    %542 = vmatprep.subr.bf16.mxu0 0
    %543 = vmatpush1.bf16.msra.mxu0 %v524
    %544 = vmatprep.subr.bf16.mxu0 0
    %545 = vmatpush1.bf16.msra.mxu0 %v523
    %546 = vmatprep.subr.bf16.mxu0 0
    %547 = vmatpush2.bf16.msra.mxu0 0
    %548 = vmatprep.subr.bf16.mxu0 0
    %549 = vmatpush2.bf16.msra.mxu0 0
    %550 = vmatprep.subr.bf16.mxu0 0
    %551 = vmatpush2.bf16.msra.mxu0 0
    %552 = vmatprep.subr.bf16.mxu0 0
    %553 = vmatpush2.bf16.msra.mxu0 0
    %554 = vmatprep.subr.bf16.mxu0 0
    %555 = vmatpush2.bf16.msra.mxu0 0
    %556 = vmatprep.subr.bf16.mxu0 0
    %557 = vmatpush2.bf16.msra.mxu0 0
    %558 = vmatprep.subr.bf16.mxu0 0
    %559 = vmatpush2.bf16.msra.mxu0 0
    %560 = vmatprep.subr.bf16.mxu0 0
    %561 = vmatpush2.bf16.msra.mxu0 0
    %562 = vmatprep.mubr.bf16.mxu0 0
    %563 = vmatmul.mubr.bf16.gmra.mxu0 %v528
    %v564 = vpop.f32.mrf.mxu0
    %v565 = vadd.f32 %v513, %v564
    %v566 = vpop.f32.mrf.mxu0
    %v567 = vpop.f32.mrf.mxu0
    %v568 = vadd.f32 %v513, %v567
    %v569 = vpop.f32.mrf.mxu0
    %570 = vdwg.mxu0
    %v571 = vadd.f32 %v565, %v34
    %v572 = vadd.f32 %v568, %v35
    %v573 = vsel %vm60, %v571, 0.0
    %574 = vadd.xlane.f32.xlu0 %v573
    %v575 = vpop.xlane.xlu0 %574
    %v576 = vsel %vm60, %v572, 0.0
    %577 = vadd.xlane.f32.xlu0 %v576
    %v578 = vpop.xlane.xlu0 %577
    %v579 = vrcp.pop 32.0
    %v580 = vmul.f32 %v575, %v579
    %v581 = vmul.f32 %v578, %v579
    %v582 = vsub.f32 %v571, %v580
    %v583 = vsub.f32 %v572, %v581
    %v584 = vmul.f32 %v582, %v582
    %v585 = vmul.f32 %v583, %v583
    %v586 = vsel %vm60, %v584, 0.0
    %587 = vadd.xlane.f32.xlu0 %v586
    %v588 = vpop.xlane.xlu0 %587
    %v589 = vsel %vm60, %v585, 0.0
    %590 = vadd.xlane.f32.xlu0 %v589
    %v591 = vpop.xlane.xlu0 %590
    %v592 = vmul.f32 %v588, %v579
    %v593 = vmul.f32 %v591, %v579
    %v594 = vadd.f32 %v592, 1e-05
    %v595 = vadd.f32 %v593, 1e-05
    %v596 = vrsqrt.pop %v594
    %v597 = vrsqrt.pop %v595
    %v598 = vmul.f32 %v582, %v596
    %v599 = vmul.f32 %v583, %v597
    %v600 = vld [vmem:[%s7] sm:$0x1]
    %v602 = vlaneseq
    %v603 = vshrl.u32 %v602, 7
    %v604 = vsub.s32 0, %v603
    %v605 = vrot.slane %v600, %v604
    %v607 = vmul.f32 %v598, %v605
    %v608 = vmul.f32 %v599, %v605
    %v609 = vld [vmem:[%s8] sm:$0x1]
    %v611 = vlaneseq
    %v612 = vshrl.u32 %v611, 7
    %v613 = vsub.s32 0, %v612
    %v614 = vrot.slane %v609, %v613
    %v616 = vadd.f32 %v607, %v614
    %v617 = vadd.f32 %v608, %v614
    %618 = vst.msk [vmem:[#allocation3] sm:$0xff] %vm60, %v616
    %619 = vst.msk [vmem:[#allocation3 + $0x8] sm:$0xff] %vm60, %v617
    // Predicated region
    $region38: #{tpu_custom_call.1} parent=1 // pred_check
      _
    $region39: #{tpu_custom_call.1} parent=1 // pred_check_branch
      %621 = sbr.rel (0) target = $region41
    $region40: #{tpu_custom_call.1} parent=1 // pred_region
      %s623 = ssub.s32 256, 256
      %624 = vsyncadd [#allocation4], %s623
      %s625 = sshll.u32 [#allocation3], 4
      %s626 = int_to_ptr.vmem [resolvable:$true] %s625
      %631 = dma.vmem_to_hbm [thread:$0]  %s626, 256, %s9, [#allocation4], 128, 128, 8
    $region41: #{tpu_custom_call.1} parent=1 // pred_fallthru
      _
    // Predicated region
    $region42: #{tpu_custom_call.1} parent=1 // pred_check
      _
    $region43: #{tpu_custom_call.1} parent=1 // pred_check_branch
      %633 = sbr.rel (0) target = $region45
    $region44: #{tpu_custom_call.1} parent=1 // pred_region
      %634 = dma.done [#allocation4], 256
    $region45: #{tpu_custom_call.1} parent=1 // pred_fallthru
      _
    %635 = vsyncpa [#allocation4], 1

</llo_original>
